<compile_context>
chip_gen: v6e
topology: v6e:2x2x1
jax: 0.10.0
libtpu: 0.0.40
codegen_flags: <defaults>
</compile_context>

<pallas_src>
import math
from functools import partial

import jax
import jax.numpy as jnp
from jax.experimental import pallas as pl
from jax.experimental.pallas import tpu as pltpu


_MIB = 1024 * 1024
_FUSED_VMEM_BUDGET = 40 * _MIB   # per-grid-step estimate gate for the fused path
_VMEM_LIMIT = 48 * _MIB          # scoped VMEM limit requested from Mosaic
_STREAM_TILE_BUDGET = 6 * _MIB   # per-x-tile budget for the two-pass fallback


def _eca_kernel_size(channels, gamma=2, beta=1):
    # timm's adaptive kernel-size rule
    t = int(abs(math.log(channels, 2) + beta) / gamma)
    return max(t if t % 2 else t + 1, 3)


def _pick_tile(dim, target, align):
    """Largest multiple of `align` that divides `dim` and is <= target, else the full dim."""
    if dim <= target:
        return dim
    t = (target // align) * align
    while t >= align:
        if dim % t == 0:
            return t
        t -= align
    return dim  # full dim is always legal


def _conv1d_sigmoid(pooled, w_ref):
    """pooled: (tb, C) f32 channel means.  w_ref: (K,) f32 SMEM.
    Zero-padded cross-correlation along channels (== Conv1d(1,1,K,bias=False)) + sigmoid."""
    tb, C = pooled.shape
    K = w_ref.shape[0]
    pad = (K - 1) // 2
    zeros = jnp.zeros((tb, pad), dtype=jnp.float32)
    padded = jnp.concatenate([zeros, pooled, zeros], axis=1)     # (tb, C + 2*pad)
    y = jnp.zeros_like(pooled)
    for i in range(K):                                           # static, tiny (K <= 9)
        y = y + w_ref[i] * padded[:, i:i + C]
    return jax.nn.sigmoid(y)


# ---------------------------------------------------------------------------
# Fused path: out = x * sigmoid(conv1d_k(mean_HW(x)))    (one read, one write)
# ---------------------------------------------------------------------------
def _eca_fused_kernel(x_ref, w_ref, o_ref, *, inv_hw):
    # x_ref / o_ref: (tb, C, HW) in x dtype; w_ref: (K,) f32 SMEM.
    x = x_ref[...]
    pooled = jnp.sum(x.astype(jnp.float32), axis=-1) * inv_hw    # (tb, C) mean in f32
    att = _conv1d_sigmoid(pooled, w_ref)                         # (tb, C) f32
    # Multiply in x's dtype (avoids a full-slab f32 temp; exact for f32 inputs).
    o_ref[...] = (x * att.astype(x.dtype)[:, :, None]).astype(o_ref.dtype)


def _fused_batch_tile(B, C, HW, itemsize):
    """Largest legal batch tile for the fused kernel, or None if it can't fit VMEM."""
    def est(tb):
        elems = tb * C * HW
        # double-buffered input + double-buffered output + f32 pooling temp margin
        return 4 * elems * itemsize + 4 * elems

    max_tb = B // 2 if B >= 2 else 1   # keep >= 2 grid steps so both v7x cores run
    for tb in range(max_tb, 0, -1):
        if B % tb == 0 and est(tb) <= _FUSED_VMEM_BUDGET:
            return tb
    return None


def _eca_fused(x3, conv_weight):
    B, C, HW = x3.shape
    tb = _fused_batch_tile(B, C, HW, x3.dtype.itemsize)
    grid = (B // tb,)
    return pl.pallas_call(
        partial(_eca_fused_kernel, inv_hw=1.0 / float(HW)),
        out_shape=jax.ShapeDtypeStruct((B, C, HW), x3.dtype),
        grid=grid,
        in_specs=[
            pl.BlockSpec((tb, C, HW), lambda bi: (bi, 0, 0)),
            pl.BlockSpec(memory_space=pltpu.MemorySpace.SMEM),
        ],
        out_specs=pl.BlockSpec((tb, C, HW), lambda bi: (bi, 0, 0)),
        compiler_params=pltpu.CompilerParams(
            dimension_semantics=("parallel",),
            vmem_limit_bytes=_VMEM_LIMIT,
        ),
    )(x3, conv_weight)


# ---------------------------------------------------------------------------
# Fallback pass 1: att = sigmoid(conv1d_k(mean_HW(x)))          -> (B, C) f32
# ---------------------------------------------------------------------------
def _eca_gate_kernel(x_ref, w_ref, att_ref, acc_ref, *, hw_total, inv_hw, mask_tail):
    # x_ref: (tb, C, thw); w_ref: (K,) f32 SMEM; att_ref/acc_ref: (tb, C) f32.
    hw_i = pl.program_id(1)

    @pl.when(hw_i == 0)
    def _():
        acc_ref[...] = jnp.zeros_like(acc_ref)

    x = x_ref[...].astype(jnp.float32)
    if mask_tail:
        # HW is not a multiple of thw: zero the garbage lanes of the last block.
        thw = x.shape[-1]
        lane = jax.lax.broadcasted_iota(jnp.int32, x.shape, dimension=x.ndim - 1)
        x = jnp.where(hw_i * thw + lane < hw_total, x, 0.0)
    acc_ref[...] += jnp.sum(x, axis=-1)                          # f32 spatial sum

    @pl.when(hw_i == pl.num_programs(1) - 1)
    def _():
        att_ref[...] = _conv1d_sigmoid(acc_ref[...] * inv_hw, w_ref)


def _eca_gate(x3, conv_weight, tile_budget_bytes=_STREAM_TILE_BUDGET):
    B, C, HW = x3.shape
    itemsize = x3.dtype.itemsize
    tb = _pick_tile(B, 8, 8)   # output block sublane dim: multiple of 8 or full B
    thw_target = max(128, (tile_budget_bytes // (itemsize * tb * C)) // 128 * 128)
    if HW <= thw_target:
        thw, mask_tail = HW, False                    # full dim -> always legal
    else:
        thw, mask_tail = thw_target, (HW % thw_target != 0)
    grid = (B // tb, pl.cdiv(HW, thw))

    return pl.pallas_call(
        partial(_eca_gate_kernel, hw_total=HW, inv_hw=1.0 / float(HW),
                mask_tail=mask_tail),
        out_shape=jax.ShapeDtypeStruct((B, C), jnp.float32),
        grid=grid,
        in_specs=[
            pl.BlockSpec((tb, C, thw), lambda bi, hwi: (bi, 0, hwi)),
            pl.BlockSpec(memory_space=pltpu.MemorySpace.SMEM),
        ],
        out_specs=pl.BlockSpec((tb, C), lambda bi, hwi: (bi, 0)),
        scratch_shapes=[pltpu.VMEM((tb, C), jnp.float32)],
        compiler_params=pltpu.CompilerParams(
            dimension_semantics=("parallel", "arbitrary"),
            vmem_limit_bytes=_VMEM_LIMIT,
        ),
    )(x3, conv_weight)


# ---------------------------------------------------------------------------
# Fallback pass 2: out = x * att   (streaming, lane-dense, HBM-bandwidth bound)
# ---------------------------------------------------------------------------
def _eca_scale_kernel(x_ref, att_ref, o_ref):
    # x_ref: (tb, tc, thw); att_ref: (tb, tc) f32; o_ref: (tb, tc, thw).
    att = att_ref[...].astype(x_ref.dtype)                       # in-kernel broadcast (XLU)
    o_ref[...] = (x_ref[...] * att[:, :, None]).astype(o_ref.dtype)


def _eca_scale(x3, att, tile_budget_bytes=_STREAM_TILE_BUDGET):
    B, C, HW = x3.shape
    itemsize = x3.dtype.itemsize
    tb = _pick_tile(B, 8, 8)        # att block sublane dim: multiple of 8 or full B
    tc = _pick_tile(C, 256, 128)    # att block lane dim: multiple of 128 or full C
    thw_target = max(128, (tile_budget_bytes // (itemsize * tb * tc)) // 128 * 128)
    thw = HW if HW <= thw_target else thw_target
    grid = (B // tb, C // tc, pl.cdiv(HW, thw))   # partial HW tail: OOB stores are clipped

    return pl.pallas_call(
        _eca_scale_kernel,
        out_shape=jax.ShapeDtypeStruct((B, C, HW), x3.dtype),
        grid=grid,
        in_specs=[
            pl.BlockSpec((tb, tc, thw), lambda bi, ci, hwi: (bi, ci, hwi)),
            pl.BlockSpec((tb, tc), lambda bi, ci, hwi: (bi, ci)),
        ],
        out_specs=pl.BlockSpec((tb, tc, thw), lambda bi, ci, hwi: (bi, ci, hwi)),
        compiler_params=pltpu.CompilerParams(
            dimension_semantics=("parallel", "parallel", "parallel"),
            vmem_limit_bytes=_VMEM_LIMIT,
        ),
    )(x3, att)


# ---------------------------------------------------------------------------
# Public forward + pure-JAX reference
# ---------------------------------------------------------------------------
def eca_module_forward(x, conv_weight):
    """x: (B, C, H, W) NCHW.  conv_weight: Conv1d(1,1,K,bias=False) weight, any shape with K elems."""
    B, C, H, W = x.shape
    HW = H * W
    x3 = x.reshape(B, C, HW)
    w = conv_weight.reshape(-1).astype(jnp.float32)
    if _fused_batch_tile(B, C, HW, x3.dtype.itemsize) is not None:
        out3 = _eca_fused(x3, w)                     # single pass: 2x HBM traffic
    else:
        att = _eca_gate(x3, w)                       # (B, C) f32
        out3 = _eca_scale(x3, att)                   # streaming scale
    return out3.reshape(B, C, H, W)


def eca_reference(x, conv_weight):
    """Pure-JAX reference for correctness checking."""
    B, C, H, W = x.shape
    w = conv_weight.reshape(-1).astype(jnp.float32)
    K = w.shape[0]
    pad = (K - 1) // 2
    pooled = x.astype(jnp.float32).mean(axis=(2, 3))             # (B, C)
    padded = jnp.pad(pooled, ((0, 0), (pad, pad)))
    y = jnp.zeros_like(pooled)
    for i in range(K):
        y = y + w[i] * padded[:, i:i + C]
    att = jax.nn.sigmoid(y)
    return x * att[:, :, None, None].astype(x.dtype)


if __name__ == "__main__":
    key = jax.random.PRNGKey(0)
    kx, kw, kx2 = jax.random.split(key, 3)

    # --- Primary test: fused single-pass path -----------------------------
    B, C, H, W = 2, 4, 16, 16
    x = jax.random.normal(kx, (B, C, H, W), dtype=jnp.float32)
    K = _eca_kernel_size(C)                                       # C=4 -> K=3
    conv_weight = jax.random.normal(kw, (K,), dtype=jnp.float32) * 0.1

    out = jax.block_until_ready(eca_module_forward(x, conv_weight))
    ref = eca_reference(x, conv_weight)
    assert out.shape == (B, C, H, W)
    assert jnp.allclose(out, ref, atol=1e-5, rtol=1e-5)

    # --- Secondary test: two-pass fallback with forced HW tiling ----------
    # H*W = 196 is not a multiple of 128; a tiny tile budget forces thw=128,
    # exercising the cdiv grid, the masked pass-1 tail and the clipped pass-2 tail.
    B2, C2, H2, W2 = 2, 4, 14, 14
    x2 = jax.random.normal(kx2, (B2, C2, H2, W2), dtype=jnp.float32)
    x2_3 = x2.reshape(B2, C2, H2 * W2)
    w32 = conv_weight.reshape(-1).astype(jnp.float32)
    att2 = _eca_gate(x2_3, w32, tile_budget_bytes=1024)
    out2_3 = _eca_scale(x2_3, att2, tile_budget_bytes=1024)
    out2 = jax.block_until_ready(out2_3.reshape(B2, C2, H2, W2))
    ref2 = eca_reference(x2, conv_weight)
    assert jnp.allclose(out2, ref2, atol=1e-5, rtol=1e-5)

    print("KERNEL_OK")
</pallas_src>

<mosaic_0001>
module attributes {stable_mosaic.version = 11 : i64} {
  func.func @_eca_fused_kernel(%arg0: i32, %arg1: memref<1x4x256xf32, #tpu.memory_space<vmem>>, %arg2: memref<3xf32, #tpu.memory_space<smem>>, %arg3: memref<1x4x256xf32, #tpu.memory_space<vmem>>) attributes {dimension_semantics = [#tpu.dimension_semantics<parallel>], iteration_bounds = array<i64: 2>, scalar_prefetch = 0 : i64, scratch_operands = 0 : i64, tpu.core_type = #tpu.core_type<tc>, window_params = [{transform_indices = @transform_0, window_bounds = array<i64: 1, 4, 256>}, {transform_indices = @transform_1, window_bounds = array<i64: 3>}, {transform_indices = @transform_2, window_bounds = array<i64: 1, 4, 256>}]} {
    %c0 = arith.constant 0 : index
    %c0_0 = arith.constant 0 : index
    %c0_1 = arith.constant 0 : index
    %0 = vector.load %arg1[%c0, %c0_0, %c0_1] : memref<1x4x256xf32, #tpu.memory_space<vmem>>, vector<1x4x256xf32>
    %cst = arith.constant dense<0.000000e+00> : vector<1x4xf32>
    %1 = vector.multi_reduction <add>, %0, %cst [2] : vector<1x4x256xf32> to vector<1x4xf32>
    %cst_2 = arith.constant 3.906250e-03 : f32
    %2 = vector.broadcast %cst_2 : f32 to vector<1x4xf32>
    %3 = arith.mulf %1, %2 : vector<1x4xf32>
    %cst_3 = arith.constant 0.000000e+00 : f32
    %4 = vector.broadcast %cst_3 : f32 to vector<1x1xf32>
    %5 = tpu.concatenate %4, %3, %4 in 1 : vector<1x1xf32>, vector<1x4xf32>, vector<1x1xf32> -> vector<1x6xf32>
    %cst_4 = arith.constant 0.000000e+00 : f32
    %6 = vector.broadcast %cst_4 : f32 to vector<1x4xf32>
    %c0_5 = arith.constant 0 : index
    %7 = memref.load %arg2[%c0_5] : memref<3xf32, #tpu.memory_space<smem>>
    %8 = vector.extract_strided_slice %5 {offsets = [0, 0], sizes = [1, 4], strides = [1, 1]} : vector<1x6xf32> to vector<1x4xf32>
    %9 = vector.broadcast %7 : f32 to vector<1x4xf32>
    %10 = arith.mulf %9, %8 : vector<1x4xf32>
    %11 = arith.addf %6, %10 : vector<1x4xf32>
    %c1 = arith.constant 1 : index
    %12 = memref.load %arg2[%c1] : memref<3xf32, #tpu.memory_space<smem>>
    %13 = vector.extract_strided_slice %5 {offsets = [0, 1], sizes = [1, 4], strides = [1, 1]} : vector<1x6xf32> to vector<1x4xf32>
    %14 = vector.broadcast %12 : f32 to vector<1x4xf32>
    %15 = arith.mulf %14, %13 : vector<1x4xf32>
    %16 = arith.addf %11, %15 : vector<1x4xf32>
    %c2 = arith.constant 2 : index
    %17 = memref.load %arg2[%c2] : memref<3xf32, #tpu.memory_space<smem>>
    %18 = vector.extract_strided_slice %5 {offsets = [0, 2], sizes = [1, 4], strides = [1, 1]} : vector<1x6xf32> to vector<1x4xf32>
    %19 = vector.broadcast %17 : f32 to vector<1x4xf32>
    %20 = arith.mulf %19, %18 : vector<1x4xf32>
    %21 = arith.addf %16, %20 : vector<1x4xf32>
    %22 = arith.negf %21 : vector<1x4xf32>
    %23 = math.exp %22 : vector<1x4xf32>
    %cst_6 = arith.constant 1.000000e+00 : f32
    %24 = vector.broadcast %cst_6 : f32 to vector<1x4xf32>
    %25 = arith.addf %24, %23 : vector<1x4xf32>
    %26 = arith.divf %24, %25 : vector<1x4xf32>
    %27 = vector.shape_cast %26 : vector<1x4xf32> to vector<1x4x1xf32>
    %28 = vector.broadcast %27 : vector<1x4x1xf32> to vector<1x4x256xf32>
    %29 = arith.mulf %0, %28 : vector<1x4x256xf32>
    %c0_7 = arith.constant 0 : index
    %c0_8 = arith.constant 0 : index
    %c0_9 = arith.constant 0 : index
    %30 = vector.load %arg3[%c0_7, %c0_8, %c0_9] : memref<1x4x256xf32, #tpu.memory_space<vmem>>, vector<1x4x256xf32>
    tpu.vector_store %arg3[%c0_7, %c0_8, %c0_9], %29 {strides = array<i32>} : memref<1x4x256xf32, #tpu.memory_space<vmem>>, vector<1x4x256xf32>,
    return
  }
  func.func @transform_0(%arg0: i32) -> (i32, i32, i32) {
    %c0_i32 = arith.constant 0 : i32
    %c0_i32_0 = arith.constant 0 : i32
    %c0_i32_1 = arith.constant 0 : i32
    return %arg0, %c0_i32, %c0_i32_0 : i32, i32, i32
  }
  func.func @transform_1(%arg0: i32) -> i32 {
    %c0_i32 = arith.constant 0 : i32
    %c0_i32_0 = arith.constant 0 : i32
    return %c0_i32 : i32
  }
  func.func @transform_2(%arg0: i32) -> (i32, i32, i32) {
    %c0_i32 = arith.constant 0 : i32
    %c0_i32_0 = arith.constant 0 : i32
    %c0_i32_1 = arith.constant 0 : i32
    return %arg0, %c0_i32, %c0_i32_0 : i32, i32, i32
  }
}

</mosaic_0001>

<llo_original>
// kernel: tpu_custom_call.1
$region0: #{tpu_custom_call.1}
  #allocation0 [shape = 'u32[]', space=smem, size = 0x4, offset = 0x4, fixed_abs, tag = 'smem constant byte address 0x4 - core index']
  #allocation1 [shape = 'u32[144,128]{1,0:T(1,128)}', space=vmem, size = 0x12000, scoped, tag = 'internal scratch']
  %s0 = inlined_call_operand.hbm [shape: f32[2,4,256], index: 0, kind: input, shape index: {}]
  %s1 = inlined_call_operand.vmem [shape: f32[3], index: 1, kind: input, shape index: {}]
  %s2 = inlined_call_operand.hbm [shape: f32[2,4,256], index: 2, kind: output, shape index: {}]
  %s3 = sld [smem:[#allocation0]]
  $region49: #{tpu_custom_call.1} parent=0
    _
  %s5 = ssub.s32 1, %s3
  %s6 = scalar_select 0, %s5, %s3
  $region1: #{tpu_custom_call.1} parent=0
    #allocation2 [shape = 'u8[8192]{0}', space=vmem, size = 0x2000, scoped, tag = 'input window, operand 0']
    #allocation3 [shape = 's32[2]{0}', space=sflag, size = 0x8, scoped, tag = 'scoped memory for tpu_custom_call.1']
    #allocation4 [shape = 's32[2]{0}', space=sflag, size = 0x8, scoped, tag = 'scoped memory for tpu_custom_call.1']
    #allocation5 [shape = 's32[2]{0}', space=sflag, size = 0x8, scoped, tag = 'scoped memory for tpu_custom_call.1']
    #allocation6 [shape = 'u8[512]{0}', space=smem, size = 0x200, scoped, tag = 'input window, operand 1, single buffered']
    #allocation7 [shape = 'u8[8192]{0}', space=vmem, size = 0x2000, scoped, tag = 'output window, operand 0']
    %7 = vsyncpa [#allocation3], 0
    %s8 = scalar_lea.sflag [#allocation3], 1
    %9 = vsyncpa %s8, 0
    %10 = vsyncpa [#allocation5], 0
    %11 = vsyncpa [#allocation4], 0
    %s12 = scalar_lea.sflag [#allocation4], 1
    %13 = vsyncpa %s12, 0
    loop: start=0, step=1, limit=4
    $region2: #{tpu_custom_call.1} parent=1 // loop_pre_header
      _
    $region3: #{tpu_custom_call.1} parent=1 // loop_header
      %s15 = sphi 0, %s19
      %p16 = scmp.ge.s32.totalorder %s15, 4
      %s25 = sphi 0, %s27
      %s28 = sphi 0, %s25
      %s29 = sphi 0, %s28
      %s45 = sphi 0, %s29
      %s49 = sphi 0, %s49
      %s51 = sphi 0, %s49
      %s52 = sphi 0, %s51
      %s66 = sphi 0, %s52
      %s72 = sphi 0, %s74
      %s75 = sphi 0, %s72
      %s76 = sphi 0, %s75
      %s92 = sphi 0, %s76
    $region4: #{tpu_custom_call.1} parent=1 // loop_header_branch
      %18 = sbr.rel (%p16) target = $region8
    $region5: #{tpu_custom_call.1} parent=1 // loop_body
      %s20 = ssub.s32 %s15, 1
      %s21 = ssub.s32 %s15, 2
      %s22 = sadd.s32 %s15, 1
      %s23 = ssub.s32 %s15, %s22
      %p24 = scmp.eq.s32.totalorder %s23, 0
      %s26 = sadd.s32 %s25, 1
      %s27 = scalar_select %p24, %s25, %s26
      %p30 = pneg %p24
      %p31 = scmp.eq.s32.totalorder %s15, 1
      %p32 = por %p30, %p31
      %p33 = scmp.ne.s32.totalorder %s25, %s28
      %p34 = scmp.eq.s32.totalorder %s15, 0
      %p35 = por %p33, %p34
      %p36 = scmp.ne.s32.totalorder %s25, %s28
      %p37 = scmp.eq.s32.totalorder %s20, 1
      %p38 = por %p36, %p37
      %p39 = scmp.ne.s32.totalorder %s28, %s29
      %p40 = scmp.eq.s32.totalorder %s20, 0
      %p41 = por %p39, %p40
      %p42 = scmp.ne.s32.totalorder %s28, %s29
      %p43 = scmp.eq.s32.totalorder %s21, 1
      %p44 = por %p42, %p43
      %p46 = scmp.ne.s32.totalorder %s29, %s45
      %p47 = scmp.eq.s32.totalorder %s21, 0
      %p48 = por %p46, %p47
      %s50 = sadd.s32 %s49, 1
      %p53 = scmp.eq.s32.totalorder %s15, 1
      %p54 = scmp.ne.s32.totalorder %s49, %s51
      %p55 = scmp.eq.s32.totalorder %s15, 0
      %p56 = por %p54, %p55
      %p57 = scmp.ne.s32.totalorder %s49, %s51
      %p58 = scmp.eq.s32.totalorder %s20, 1
      %p59 = por %p57, %p58
      %p60 = scmp.ne.s32.totalorder %s51, %s52
      %p61 = scmp.eq.s32.totalorder %s20, 0
      %p62 = por %p60, %p61
      %p63 = scmp.ne.s32.totalorder %s51, %s52
      %p64 = scmp.eq.s32.totalorder %s21, 1
      %p65 = por %p63, %p64
      %p67 = scmp.ne.s32.totalorder %s52, %s66
      %p68 = scmp.eq.s32.totalorder %s21, 0
      %p69 = por %p67, %p68
      %s70 = ssub.s32 %s15, %s22
      %p71 = scmp.eq.s32.totalorder %s70, 0
      %s73 = sadd.s32 %s72, 1
      %s74 = scalar_select %p71, %s72, %s73
      %p77 = pneg %p71
      %p78 = scmp.eq.s32.totalorder %s15, 1
      %p79 = por %p77, %p78
      %p80 = scmp.ne.s32.totalorder %s72, %s75
      %p81 = scmp.eq.s32.totalorder %s15, 0
      %p82 = por %p80, %p81
      %p83 = scmp.ne.s32.totalorder %s72, %s75
      %p84 = scmp.eq.s32.totalorder %s20, 1
      %p85 = por %p83, %p84
      %p86 = scmp.ne.s32.totalorder %s75, %s76
      %p87 = scmp.eq.s32.totalorder %s20, 0
      %p88 = por %p86, %p87
      %p89 = scmp.ne.s32.totalorder %s75, %s76
      %p90 = scmp.eq.s32.totalorder %s21, 1
      %p91 = por %p89, %p90
      %p93 = scmp.ne.s32.totalorder %s76, %s92
      %p94 = scmp.eq.s32.totalorder %s21, 0
      %p95 = por %p93, %p94
      %p96 = scmp.le.s32.totalorder 1, %s15
      %p97 = scmp.lt.s32.totalorder %s15, 3
      %p98 = pnand %p96, %p97
      %p99 = pneg %p98
      // Predicated region
      $region9: #{tpu_custom_call.1} parent=5 // pred_check
        _
      $region10: #{tpu_custom_call.1} parent=5 // pred_check_branch
        %101 = sbr.rel (%p98) target = $region12
      $region11: #{tpu_custom_call.1} parent=5 // pred_region
        %s102 = ssub.s32 %s15, 1
        // Predicated region
        $region13: #{tpu_custom_call.1} parent=11 // pred_check
          %p103 = pneg %p62
        $region14: #{tpu_custom_call.1} parent=11 // pred_check_branch
          %105 = sbr.rel (%p103) target = $region16
        $region15: #{tpu_custom_call.1} parent=11 // pred_region
          %s107 = ssub.s32 16, 16
          %108 = vsyncadd [#allocation5], %s107
          %s110 = sshll.u32 %s1, 4
          %s111 = int_to_ptr.vmem [resolvable:$true] %s110
          %113 = dma.vmem_to_smem %s111, 16, [#allocation6], [#allocation5]
        $region16: #{tpu_custom_call.1} parent=11 // pred_fallthru
          _
      $region12: #{tpu_custom_call.1} parent=5 // pred_fallthru
        _
      %p114 = scmp.lt.s32.totalorder %s15, 2
      // Predicated region
      $region17: #{tpu_custom_call.1} parent=5 // pred_check
        %p115 = pneg %p114
      $region18: #{tpu_custom_call.1} parent=5 // pred_check_branch
        %117 = sbr.rel (%p115) target = $region20
      $region19: #{tpu_custom_call.1} parent=5 // pred_region
        // Predicated region
        $region21: #{tpu_custom_call.1} parent=19 // pred_check
          %p118 = pneg %p35
        $region22: #{tpu_custom_call.1} parent=19 // pred_check_branch
          %120 = sbr.rel (%p118) target = $region24
        $region23: #{tpu_custom_call.1} parent=19 // pred_region
          %s121 = sand.u32 %s25, 1
          %s122 = scalar_lea.sflag [#allocation3], %s121
          %s123 = sand.u32 %s25, 1
          %s124 = smul.addr %s123, 8
          %s125 = scalar_lea.vmem [#allocation2], %s124
          %s127 = ssub.s32 128, 128
          %128 = vsyncadd %s122, %s127
          %s129 = smul.addr %s15, 2
          %s130 = smul.addr %s129, 64
          %s131 = scalar_lea.hbm %s0, %s130
          %s133 = sshll.u32 %s125, 4
          %s134 = int_to_ptr.vmem [resolvable:$true] %s133
          %136 = dma.hbm_to_vmem [thread:$0]  %s131, 128, %s134, %s122
        $region24: #{tpu_custom_call.1} parent=19 // pred_fallthru
          _
      $region20: #{tpu_custom_call.1} parent=5 // pred_fallthru
        _
      %p137 = scmp.le.s32.totalorder 1, %s15
      %p138 = scmp.lt.s32.totalorder %s15, 3
      %p139 = pnand %p137, %p138
      %p140 = pneg %p139
      // Predicated region
      $region25: #{tpu_custom_call.1} parent=5 // pred_check
        _
      $region26: #{tpu_custom_call.1} parent=5 // pred_check_branch
        %142 = sbr.rel (%p139) target = $region28
      $region27: #{tpu_custom_call.1} parent=5 // pred_region
        %s143 = ssub.s32 %s15, 1
        %s144 = sand.u32 %s28, 1
        %s145 = scalar_lea.sflag [#allocation3], %s144
        %s146 = sand.u32 %s28, 1
        %s147 = smul.addr %s146, 8
        %s148 = scalar_lea.vmem [#allocation2], %s147
        // Predicated region
        $region29: #{tpu_custom_call.1} parent=27 // pred_check
          %p149 = pneg %p41
        $region30: #{tpu_custom_call.1} parent=27 // pred_check_branch
          %151 = sbr.rel (%p149) target = $region32
        $region31: #{tpu_custom_call.1} parent=27 // pred_region
          %152 = dma.done %s145, 128
        $region32: #{tpu_custom_call.1} parent=27 // pred_fallthru
          _
        // Predicated region
        $region33: #{tpu_custom_call.1} parent=27 // pred_check
          %p153 = pneg %p62
        $region34: #{tpu_custom_call.1} parent=27 // pred_check_branch
          %155 = sbr.rel (%p153) target = $region36
        $region35: #{tpu_custom_call.1} parent=27 // pred_region
          %156 = dma.done [#allocation5], 16
        $region36: #{tpu_custom_call.1} parent=27 // pred_fallthru
          _
        %157 = sfence
        %s158 = sand.u32 %s28, 1
        %s159 = scalar_lea.sflag [#allocation3], %s158
        %s160 = sand.u32 %s28, 1
        %s161 = smul.addr %s160, 8
        %s162 = scalar_lea.vmem [#allocation2], %s161
        %p163 = pneg %p41
        %p164 = pneg %p38
        %p165 = pneg %p62
        %p166 = pneg %p59
        %p167 = pneg %p88
        %p168 = pneg %p85
        %s169 = sand.u32 %s75, 1
        %s170 = scalar_lea.sflag [#allocation4], %s169
        %s171 = sand.u32 %s75, 1
        %s172 = smul.addr %s171, 8
        %s173 = scalar_lea.vmem [#allocation7], %s172
        %v174 = vld [vmem:[%s148] sm:$0xff]
        %v176 = vcombine.high %v174, %v174
        %vm178 = vcmask 1043456
        %v179 = vsel %vm178, %v174, 0.0
        %v180 = vsel %vm178, %v176, 0.0
        %v181 = vadd.f32 %v179, %v180
        %182 = vadd.xlane.f32.xlu0 %v181
        %v183 = vpop.xlane.xlu0 %182
        %v184 = vmul.f32 %v183, 0.00390625
        %v186 = vlaneseq
        %v187 = vand.u32 %v186, 127
        %v188 = vadd.s32 %v187, 4294967295
        %v189 = vlaneseq
        %v190 = vshrl.u32 %v189, 7
        %v191 = vsub.s32 %v188, %v190
        %v192 = vrot.slane %v184, %v191
        %vm194 = vcmask 7168
        %v195 = vsel %vm194, 0.0, %v192
        %vm196 = vcmask 39936
        %v197 = vsel %vm196, %v195, 0.0
        %s198 = sld [smem:[#allocation6]]
        %v199 = vstv %s198
        %v200 = vmul.f32 %v199, %v197
        %v201 = vadd.f32 %v200, 0.0
        %s202 = sld [smem:[#allocation6 + $0x1]]
        %v203 = vstv %s202
        %v204 = vmul.f32 %v203, %v197
        %206 = vrot.lane.b32.xlu0 %v204, 127
        %v207 = vpop.permute.xlu0 %206
        %v209 = vadd.f32 %v201, %v207
        %s210 = sld [smem:[#allocation6 + $0x2]]
        %v211 = vstv %s210
        %v212 = vmul.f32 %v211, %v197
        %214 = vrot.lane.b32.xlu0 %v212, 126
        %v215 = vpop.permute.xlu0 %214
        %v217 = vadd.f32 %v209, %v215
        %v218 = vxor.u32 %v217, 2147483648
        %v219 = vmul.f32 %v218, 1.442695
        %v220 = vpow.pop %v219
        %v221 = vadd.f32 %v220, 1.0
        %v222 = vrcp.pop %v221
        %v223 = vmul.f32 1.0, %v222
        %v224 = vlaneseq
        %v225 = vshrl.u32 %v224, 7
        %v226 = vsub.s32 0, %v225
        %v227 = vrot.slane %v223, %v226
        %229 = vbcast.lane.b32.xlu0 %v227, 256
        %v230 = vpop.permute.xlu0 %229
        %v233 = vunpack.c.l.s4 839922192
        %v234 = vunpack.c.0.s8 %v233
        %v235 = vlaneseq
        %v236 = vshrl.u32 %v235, 7
        %v237 = vsub.s32 %v234, %v236
        %v238 = vrot.slane %v230, %v237
        %v240 = vmul.f32 %v174, %v238
        %241 = vst [vmem:[%s173] sm:$0xff] %v240
        %s242 = sand.u32 %s75, 1
        %s243 = scalar_lea.sflag [#allocation4], %s242
        %s244 = sand.u32 %s75, 1
        %s245 = smul.addr %s244, 8
        %s246 = scalar_lea.vmem [#allocation7], %s245
        // Predicated region
        $region37: #{tpu_custom_call.1} parent=27 // pred_check
          %p247 = pneg %p85
        $region38: #{tpu_custom_call.1} parent=27 // pred_check_branch
          %249 = sbr.rel (%p247) target = $region40
        $region39: #{tpu_custom_call.1} parent=27 // pred_region
          %s251 = ssub.s32 128, 128
          %252 = vsyncadd %s243, %s251
          %s253 = smul.addr %s20, 2
          %s254 = smul.addr %s253, 64
          %s255 = scalar_lea.hbm %s2, %s254
          %s257 = sshll.u32 %s246, 4
          %s258 = int_to_ptr.vmem [resolvable:$true] %s257
          %260 = dma.vmem_to_hbm [thread:$0]  %s258, 128, %s255, %s243
        $region40: #{tpu_custom_call.1} parent=27 // pred_fallthru
          _
      $region28: #{tpu_custom_call.1} parent=5 // pred_fallthru
        _
      %p261 = scmp.le.s32.totalorder 2, %s15
      // Predicated region
      $region41: #{tpu_custom_call.1} parent=5 // pred_check
        %p262 = pneg %p261
      $region42: #{tpu_custom_call.1} parent=5 // pred_check_branch
        %264 = sbr.rel (%p262) target = $region44
      $region43: #{tpu_custom_call.1} parent=5 // pred_region
        %s265 = ssub.s32 %s15, 2
        // Predicated region
        $region45: #{tpu_custom_call.1} parent=43 // pred_check
          %p266 = pneg %p91
        $region46: #{tpu_custom_call.1} parent=43 // pred_check_branch
          %268 = sbr.rel (%p266) target = $region48
        $region47: #{tpu_custom_call.1} parent=43 // pred_region
          %s269 = sand.u32 %s76, 1
          %s270 = scalar_lea.sflag [#allocation4], %s269
          %s271 = sand.u32 %s76, 1
          %s272 = smul.addr %s271, 8
          %s273 = scalar_lea.vmem [#allocation7], %s272
          %274 = dma.done %s270, 128
        $region48: #{tpu_custom_call.1} parent=43 // pred_fallthru
          _
      $region44: #{tpu_custom_call.1} parent=5 // pred_fallthru
        _
    $region6: #{tpu_custom_call.1} parent=1 // loop_footer
      %s19 = sadd.s32 1, %s15
    $region7: #{tpu_custom_call.1} parent=1 // loop_footer_branch
      %14 = sbr.rel target = $region3
    $region8: #{tpu_custom_call.1} parent=1 // loop_exit
      _
    %275 = vsyncpa [#allocation3], 1
    %s276 = scalar_lea.sflag [#allocation3], 1
    %277 = vsyncpa %s276, 1
    %278 = vsyncpa [#allocation4], 1
    %s279 = scalar_lea.sflag [#allocation4], 1
    %280 = vsyncpa %s279, 1
    %281 = vsyncpa [#allocation5], 1
    %s282 = scalar_lea.sflag [#allocation5], 1
    %283 = vsyncpa %s282, 1

</llo_original>
